<compile_context>
chip_gen: v7x
topology: tpu7x:2x2x1
jax: 0.10.0
libtpu: 0.0.40
codegen_flags: <defaults>
</compile_context>

<pallas_src>
import jax
import jax.numpy as jnp
from jax.experimental import pallas as pl
from jax.experimental.pallas import tpu as pltpu

# Fixed parameters from FSSwishLayer.__init__ (K = 16), baked as Python floats
# so they lower to vector-immediate operands inside the kernel.
SWISH_H = [0.4462, 0.9426, 0.5828, 0.2679, 0.1929, 1.1032, 0.0062, 1.7608,
           1.6892, 1.0465, 2.2203, -0.0518, 0.9965, 1.2357, 0.7535, 1.3039]
SWISH_D = [0.1441, 1.0263, 0.5819, 0.2583, 0.089, 0.8074, 0.1049, 1.2033,
           1.8082, 0.4312, 2.2586, -0.2693, 0.8391, 0.0463, 0.2339, 0.1115]
SWISH_T = [-0.4326, 0.7987, 0.1965, -0.0293, 1.7898, 0.4043, -0.1738, -0.0356,
           2.1835, -0.0467, 2.3067, -1.7284, 1.281, 0.942, -0.245, -0.5279]
K = 16

LANE = 128
SUBLANE = 8
BLOCK_ROWS = 8192  # 8192 x 128 x f32 = 4 MiB per buffer; ~16 MiB double-buffered in+out.


def _round_up(a, b):
    return ((a + b - 1) // b) * b


def fs_swish_kernel(x_ref, o_ref):
    """Elementwise FS-Swish spiking accumulation (K=16 fully unrolled).

    x_ref, o_ref : VMEM tiles (block_rows, 128) in the caller's dtype.
    Compute is in f32; constants are baked immediates (no scalar operands).
    """
    v = x_ref[...].astype(jnp.float32)
    out = None
    for t in range(K):
        # mask = (v - T[t] > 0)  <=>  v > T[t]   (saves one sub per step)
        mask = v > SWISH_T[t]
        # out += z * d[t]  ->  select instead of convert+mul+add;
        # step 0 initializes the accumulator directly (no zeros + add).
        incr = jnp.where(mask, SWISH_D[t], 0.0)
        out = incr if out is None else out + incr
        # v -= z * h[t]    ->  select; the last step's v is never read.
        if t < K - 1:
            v = jnp.where(mask, v - SWISH_H[t], v)
    o_ref[...] = out.astype(o_ref.dtype)


def fs_swish_pallas(x):
    """Apply FS-Swish to an NCHW (or any-shape) array, dtype-preserving."""
    orig_shape = x.shape
    xf = x.reshape(-1)  # original dtype; cast happens inside the kernel

    n = xf.shape[0]
    padded = _round_up(n, LANE)
    if padded != n:
        # Minimal alignment padding only, in the original dtype (one HBM pass).
        xf = jnp.pad(xf, (0, padded - n))
    rows = padded // LANE
    x2d = xf.reshape(rows, LANE)

    # Aim for >= 2 grid steps (v7x megacore sharding) while keeping block_rows
    # a multiple of SUBLANE=8 (required for partial-last-block masking), and
    # cap at BLOCK_ROWS. Tiny inputs collapse to one full-extent block.
    half = _round_up(pl.cdiv(rows, 2), SUBLANE)
    block_rows = min(BLOCK_ROWS, half)
    if block_rows >= rows:
        block_rows = rows  # single block == full row extent (always legal)
    grid = (pl.cdiv(rows, block_rows),)

    itemsize = jnp.dtype(x.dtype).itemsize
    cost = pl.CostEstimate(
        flops=80 * padded,              # ~5 VALU ops x K=16 per element
        transcendentals=0,
        bytes_accessed=2 * padded * itemsize,
    )

    out2d = pl.pallas_call(
        fs_swish_kernel,
        out_shape=jax.ShapeDtypeStruct((rows, LANE), x.dtype),
        grid=grid,
        in_specs=[pl.BlockSpec((block_rows, LANE), lambda i: (i, 0))],
        out_specs=pl.BlockSpec((block_rows, LANE), lambda i: (i, 0)),
        compiler_params=pltpu.CompilerParams(
            dimension_semantics=("parallel",)),
        cost_estimate=cost,
    )(x2d)

    out = out2d.reshape(-1)
    if padded != n:
        out = out[:n]
    return out.reshape(orig_shape)


def fs_swish_ref(x):
    """Pure-JAX reference matching the PyTorch forward exactly (f32 compute)."""
    x = x.astype(jnp.float32)
    out = jnp.zeros_like(x)
    v = x
    for t in range(K):
        v_scaled = v - SWISH_T[t]
        z = (v_scaled > 0.0).astype(jnp.float32)
        out = out + z * SWISH_D[t]
        v = v - z * SWISH_H[t]
    return out


if __name__ == "__main__":
    key = jax.random.PRNGKey(0)
    # NCHW input, small shapes: batch=2, channels=4, spatial=16x16
    x = jax.random.normal(key, (2, 4, 16, 16), dtype=jnp.float32) * 2.0

    y = fs_swish_pallas(x)
    jax.block_until_ready(y)

    y_ref = fs_swish_ref(x)
    assert y.shape == x.shape and y.dtype == x.dtype
    assert jnp.allclose(y, y_ref, atol=1e-6, rtol=1e-6), "mismatch vs reference"

    # Shape whose row count is NOT a multiple of block_rows (ragged tail /
    # partial-block masking regression check): 2080 rows of 128 lanes.
    x2 = jax.random.normal(jax.random.PRNGKey(1), (5, 13, 64, 64),
                           dtype=jnp.float32) * 2.0
    y2 = fs_swish_pallas(x2)
    jax.block_until_ready(y2)
    assert jnp.allclose(y2, fs_swish_ref(x2), atol=1e-6, rtol=1e-6), \
        "mismatch vs reference (ragged tail block)"

    # Dtype-native path: bf16 input stays bf16 through HBM, compute in f32.
    x3 = (jax.random.normal(jax.random.PRNGKey(2), (2, 4, 16, 16),
                            dtype=jnp.float32) * 2.0).astype(jnp.bfloat16)
    y3 = fs_swish_pallas(x3)
    jax.block_until_ready(y3)
    assert y3.dtype == jnp.bfloat16
    y3_ref = fs_swish_ref(x3).astype(jnp.bfloat16)
    assert jnp.allclose(y3.astype(jnp.float32), y3_ref.astype(jnp.float32),
                        atol=1e-5, rtol=1e-5), "mismatch vs reference (bf16)"

    print("KERNEL_OK")
</pallas_src>

<mosaic_0001>
module attributes {stable_mosaic.version = 11 : i64} {
  func.func @fs_swish_kernel(%arg0: i32, %arg1: memref<8x128xf32, #tpu.memory_space<vmem>>, %arg2: memref<8x128xf32, #tpu.memory_space<vmem>>) attributes {dimension_semantics = [#tpu.dimension_semantics<parallel>], iteration_bounds = array<i64: 2>, scalar_prefetch = 0 : i64, scratch_operands = 0 : i64, tpu.core_type = #tpu.core_type<tc>, window_params = [{transform_indices = @transform_0, window_bounds = array<i64: 8, 128>}, {transform_indices = @transform_1, window_bounds = array<i64: 8, 128>}]} {
    %c0 = arith.constant 0 : index
    %c0_0 = arith.constant 0 : index
    %0 = vector.load %arg1[%c0, %c0_0] : memref<8x128xf32, #tpu.memory_space<vmem>>, vector<8x128xf32>
    %cst = arith.constant -4.326000e-01 : f32
    %1 = vector.broadcast %cst : f32 to vector<8x128xf32>
    %2 = arith.cmpf ogt, %0, %1 : vector<8x128xf32>
    %cst_1 = arith.constant 1.441000e-01 : f32
    %cst_2 = arith.constant 0.000000e+00 : f32
    %3 = vector.broadcast %cst_1 : f32 to vector<8x128xf32>
    %4 = vector.broadcast %cst_2 : f32 to vector<8x128xf32>
    %5 = arith.select %2, %3, %4 : vector<8x128xi1>, vector<8x128xf32>
    %cst_3 = arith.constant 4.462000e-01 : f32
    %6 = vector.broadcast %cst_3 : f32 to vector<8x128xf32>
    %7 = arith.subf %0, %6 : vector<8x128xf32>
    %8 = arith.select %2, %7, %0 : vector<8x128xi1>, vector<8x128xf32>
    %cst_4 = arith.constant 0.798699975 : f32
    %9 = vector.broadcast %cst_4 : f32 to vector<8x128xf32>
    %10 = arith.cmpf ogt, %8, %9 : vector<8x128xf32>
    %cst_5 = arith.constant 1.026300e+00 : f32
    %cst_6 = arith.constant 0.000000e+00 : f32
    %11 = vector.broadcast %cst_5 : f32 to vector<8x128xf32>
    %12 = vector.broadcast %cst_6 : f32 to vector<8x128xf32>
    %13 = arith.select %10, %11, %12 : vector<8x128xi1>, vector<8x128xf32>
    %14 = arith.addf %5, %13 : vector<8x128xf32>
    %cst_7 = arith.constant 9.426000e-01 : f32
    %15 = vector.broadcast %cst_7 : f32 to vector<8x128xf32>
    %16 = arith.subf %8, %15 : vector<8x128xf32>
    %17 = arith.select %10, %16, %8 : vector<8x128xi1>, vector<8x128xf32>
    %cst_8 = arith.constant 1.965000e-01 : f32
    %18 = vector.broadcast %cst_8 : f32 to vector<8x128xf32>
    %19 = arith.cmpf ogt, %17, %18 : vector<8x128xf32>
    %cst_9 = arith.constant 5.819000e-01 : f32
    %cst_10 = arith.constant 0.000000e+00 : f32
    %20 = vector.broadcast %cst_9 : f32 to vector<8x128xf32>
    %21 = vector.broadcast %cst_10 : f32 to vector<8x128xf32>
    %22 = arith.select %19, %20, %21 : vector<8x128xi1>, vector<8x128xf32>
    %23 = arith.addf %14, %22 : vector<8x128xf32>
    %cst_11 = arith.constant 5.828000e-01 : f32
    %24 = vector.broadcast %cst_11 : f32 to vector<8x128xf32>
    %25 = arith.subf %17, %24 : vector<8x128xf32>
    %26 = arith.select %19, %25, %17 : vector<8x128xi1>, vector<8x128xf32>
    %cst_12 = arith.constant -2.930000e-02 : f32
    %27 = vector.broadcast %cst_12 : f32 to vector<8x128xf32>
    %28 = arith.cmpf ogt, %26, %27 : vector<8x128xf32>
    %cst_13 = arith.constant 2.583000e-01 : f32
    %cst_14 = arith.constant 0.000000e+00 : f32
    %29 = vector.broadcast %cst_13 : f32 to vector<8x128xf32>
    %30 = vector.broadcast %cst_14 : f32 to vector<8x128xf32>
    %31 = arith.select %28, %29, %30 : vector<8x128xi1>, vector<8x128xf32>
    %32 = arith.addf %23, %31 : vector<8x128xf32>
    %cst_15 = arith.constant 2.679000e-01 : f32
    %33 = vector.broadcast %cst_15 : f32 to vector<8x128xf32>
    %34 = arith.subf %26, %33 : vector<8x128xf32>
    %35 = arith.select %28, %34, %26 : vector<8x128xi1>, vector<8x128xf32>
    %cst_16 = arith.constant 1.789800e+00 : f32
    %36 = vector.broadcast %cst_16 : f32 to vector<8x128xf32>
    %37 = arith.cmpf ogt, %35, %36 : vector<8x128xf32>
    %cst_17 = arith.constant 8.900000e-02 : f32
    %cst_18 = arith.constant 0.000000e+00 : f32
    %38 = vector.broadcast %cst_17 : f32 to vector<8x128xf32>
    %39 = vector.broadcast %cst_18 : f32 to vector<8x128xf32>
    %40 = arith.select %37, %38, %39 : vector<8x128xi1>, vector<8x128xf32>
    %41 = arith.addf %32, %40 : vector<8x128xf32>
    %cst_19 = arith.constant 1.929000e-01 : f32
    %42 = vector.broadcast %cst_19 : f32 to vector<8x128xf32>
    %43 = arith.subf %35, %42 : vector<8x128xf32>
    %44 = arith.select %37, %43, %35 : vector<8x128xi1>, vector<8x128xf32>
    %cst_20 = arith.constant 4.043000e-01 : f32
    %45 = vector.broadcast %cst_20 : f32 to vector<8x128xf32>
    %46 = arith.cmpf ogt, %44, %45 : vector<8x128xf32>
    %cst_21 = arith.constant 8.074000e-01 : f32
    %cst_22 = arith.constant 0.000000e+00 : f32
    %47 = vector.broadcast %cst_21 : f32 to vector<8x128xf32>
    %48 = vector.broadcast %cst_22 : f32 to vector<8x128xf32>
    %49 = arith.select %46, %47, %48 : vector<8x128xi1>, vector<8x128xf32>
    %50 = arith.addf %41, %49 : vector<8x128xf32>
    %cst_23 = arith.constant 1.103200e+00 : f32
    %51 = vector.broadcast %cst_23 : f32 to vector<8x128xf32>
    %52 = arith.subf %44, %51 : vector<8x128xf32>
    %53 = arith.select %46, %52, %44 : vector<8x128xi1>, vector<8x128xf32>
    %cst_24 = arith.constant -1.738000e-01 : f32
    %54 = vector.broadcast %cst_24 : f32 to vector<8x128xf32>
    %55 = arith.cmpf ogt, %53, %54 : vector<8x128xf32>
    %cst_25 = arith.constant 1.049000e-01 : f32
    %cst_26 = arith.constant 0.000000e+00 : f32
    %56 = vector.broadcast %cst_25 : f32 to vector<8x128xf32>
    %57 = vector.broadcast %cst_26 : f32 to vector<8x128xf32>
    %58 = arith.select %55, %56, %57 : vector<8x128xi1>, vector<8x128xf32>
    %59 = arith.addf %50, %58 : vector<8x128xf32>
    %cst_27 = arith.constant 6.200000e-03 : f32
    %60 = vector.broadcast %cst_27 : f32 to vector<8x128xf32>
    %61 = arith.subf %53, %60 : vector<8x128xf32>
    %62 = arith.select %55, %61, %53 : vector<8x128xi1>, vector<8x128xf32>
    %cst_28 = arith.constant -3.560000e-02 : f32
    %63 = vector.broadcast %cst_28 : f32 to vector<8x128xf32>
    %64 = arith.cmpf ogt, %62, %63 : vector<8x128xf32>
    %cst_29 = arith.constant 1.203300e+00 : f32
    %cst_30 = arith.constant 0.000000e+00 : f32
    %65 = vector.broadcast %cst_29 : f32 to vector<8x128xf32>
    %66 = vector.broadcast %cst_30 : f32 to vector<8x128xf32>
    %67 = arith.select %64, %65, %66 : vector<8x128xi1>, vector<8x128xf32>
    %68 = arith.addf %59, %67 : vector<8x128xf32>
    %cst_31 = arith.constant 1.760800e+00 : f32
    %69 = vector.broadcast %cst_31 : f32 to vector<8x128xf32>
    %70 = arith.subf %62, %69 : vector<8x128xf32>
    %71 = arith.select %64, %70, %62 : vector<8x128xi1>, vector<8x128xf32>
    %cst_32 = arith.constant 2.183500e+00 : f32
    %72 = vector.broadcast %cst_32 : f32 to vector<8x128xf32>
    %73 = arith.cmpf ogt, %71, %72 : vector<8x128xf32>
    %cst_33 = arith.constant 1.808200e+00 : f32
    %cst_34 = arith.constant 0.000000e+00 : f32
    %74 = vector.broadcast %cst_33 : f32 to vector<8x128xf32>
    %75 = vector.broadcast %cst_34 : f32 to vector<8x128xf32>
    %76 = arith.select %73, %74, %75 : vector<8x128xi1>, vector<8x128xf32>
    %77 = arith.addf %68, %76 : vector<8x128xf32>
    %cst_35 = arith.constant 1.689200e+00 : f32
    %78 = vector.broadcast %cst_35 : f32 to vector<8x128xf32>
    %79 = arith.subf %71, %78 : vector<8x128xf32>
    %80 = arith.select %73, %79, %71 : vector<8x128xi1>, vector<8x128xf32>
    %cst_36 = arith.constant -4.670000e-02 : f32
    %81 = vector.broadcast %cst_36 : f32 to vector<8x128xf32>
    %82 = arith.cmpf ogt, %80, %81 : vector<8x128xf32>
    %cst_37 = arith.constant 4.312000e-01 : f32
    %cst_38 = arith.constant 0.000000e+00 : f32
    %83 = vector.broadcast %cst_37 : f32 to vector<8x128xf32>
    %84 = vector.broadcast %cst_38 : f32 to vector<8x128xf32>
    %85 = arith.select %82, %83, %84 : vector<8x128xi1>, vector<8x128xf32>
    %86 = arith.addf %77, %85 : vector<8x128xf32>
    %cst_39 = arith.constant 1.046500e+00 : f32
    %87 = vector.broadcast %cst_39 : f32 to vector<8x128xf32>
    %88 = arith.subf %80, %87 : vector<8x128xf32>
    %89 = arith.select %82, %88, %80 : vector<8x128xi1>, vector<8x128xf32>
    %cst_40 = arith.constant 2.306700e+00 : f32
    %90 = vector.broadcast %cst_40 : f32 to vector<8x128xf32>
    %91 = arith.cmpf ogt, %89, %90 : vector<8x128xf32>
    %cst_41 = arith.constant 2.258600e+00 : f32
    %cst_42 = arith.constant 0.000000e+00 : f32
    %92 = vector.broadcast %cst_41 : f32 to vector<8x128xf32>
    %93 = vector.broadcast %cst_42 : f32 to vector<8x128xf32>
    %94 = arith.select %91, %92, %93 : vector<8x128xi1>, vector<8x128xf32>
    %95 = arith.addf %86, %94 : vector<8x128xf32>
    %cst_43 = arith.constant 2.220300e+00 : f32
    %96 = vector.broadcast %cst_43 : f32 to vector<8x128xf32>
    %97 = arith.subf %89, %96 : vector<8x128xf32>
    %98 = arith.select %91, %97, %89 : vector<8x128xi1>, vector<8x128xf32>
    %cst_44 = arith.constant -1.728400e+00 : f32
    %99 = vector.broadcast %cst_44 : f32 to vector<8x128xf32>
    %100 = arith.cmpf ogt, %98, %99 : vector<8x128xf32>
    %cst_45 = arith.constant -2.693000e-01 : f32
    %cst_46 = arith.constant 0.000000e+00 : f32
    %101 = vector.broadcast %cst_45 : f32 to vector<8x128xf32>
    %102 = vector.broadcast %cst_46 : f32 to vector<8x128xf32>
    %103 = arith.select %100, %101, %102 : vector<8x128xi1>, vector<8x128xf32>
    %104 = arith.addf %95, %103 : vector<8x128xf32>
    %cst_47 = arith.constant -5.180000e-02 : f32
    %105 = vector.broadcast %cst_47 : f32 to vector<8x128xf32>
    %106 = arith.subf %98, %105 : vector<8x128xf32>
    %107 = arith.select %100, %106, %98 : vector<8x128xi1>, vector<8x128xf32>
    %cst_48 = arith.constant 1.281000e+00 : f32
    %108 = vector.broadcast %cst_48 : f32 to vector<8x128xf32>
    %109 = arith.cmpf ogt, %107, %108 : vector<8x128xf32>
    %cst_49 = arith.constant 8.391000e-01 : f32
    %cst_50 = arith.constant 0.000000e+00 : f32
    %110 = vector.broadcast %cst_49 : f32 to vector<8x128xf32>
    %111 = vector.broadcast %cst_50 : f32 to vector<8x128xf32>
    %112 = arith.select %109, %110, %111 : vector<8x128xi1>, vector<8x128xf32>
    %113 = arith.addf %104, %112 : vector<8x128xf32>
    %cst_51 = arith.constant 9.965000e-01 : f32
    %114 = vector.broadcast %cst_51 : f32 to vector<8x128xf32>
    %115 = arith.subf %107, %114 : vector<8x128xf32>
    %116 = arith.select %109, %115, %107 : vector<8x128xi1>, vector<8x128xf32>
    %cst_52 = arith.constant 0.941999971 : f32
    %117 = vector.broadcast %cst_52 : f32 to vector<8x128xf32>
    %118 = arith.cmpf ogt, %116, %117 : vector<8x128xf32>
    %cst_53 = arith.constant 4.630000e-02 : f32
    %cst_54 = arith.constant 0.000000e+00 : f32
    %119 = vector.broadcast %cst_53 : f32 to vector<8x128xf32>
    %120 = vector.broadcast %cst_54 : f32 to vector<8x128xf32>
    %121 = arith.select %118, %119, %120 : vector<8x128xi1>, vector<8x128xf32>
    %122 = arith.addf %113, %121 : vector<8x128xf32>
    %cst_55 = arith.constant 1.235700e+00 : f32
    %123 = vector.broadcast %cst_55 : f32 to vector<8x128xf32>
    %124 = arith.subf %116, %123 : vector<8x128xf32>
    %125 = arith.select %118, %124, %116 : vector<8x128xi1>, vector<8x128xf32>
    %cst_56 = arith.constant -2.450000e-01 : f32
    %126 = vector.broadcast %cst_56 : f32 to vector<8x128xf32>
    %127 = arith.cmpf ogt, %125, %126 : vector<8x128xf32>
    %cst_57 = arith.constant 2.339000e-01 : f32
    %cst_58 = arith.constant 0.000000e+00 : f32
    %128 = vector.broadcast %cst_57 : f32 to vector<8x128xf32>
    %129 = vector.broadcast %cst_58 : f32 to vector<8x128xf32>
    %130 = arith.select %127, %128, %129 : vector<8x128xi1>, vector<8x128xf32>
    %131 = arith.addf %122, %130 : vector<8x128xf32>
    %cst_59 = arith.constant 7.535000e-01 : f32
    %132 = vector.broadcast %cst_59 : f32 to vector<8x128xf32>
    %133 = arith.subf %125, %132 : vector<8x128xf32>
    %134 = arith.select %127, %133, %125 : vector<8x128xi1>, vector<8x128xf32>
    %cst_60 = arith.constant -5.279000e-01 : f32
    %135 = vector.broadcast %cst_60 : f32 to vector<8x128xf32>
    %136 = arith.cmpf ogt, %134, %135 : vector<8x128xf32>
    %cst_61 = arith.constant 1.115000e-01 : f32
    %cst_62 = arith.constant 0.000000e+00 : f32
    %137 = vector.broadcast %cst_61 : f32 to vector<8x128xf32>
    %138 = vector.broadcast %cst_62 : f32 to vector<8x128xf32>
    %139 = arith.select %136, %137, %138 : vector<8x128xi1>, vector<8x128xf32>
    %140 = arith.addf %131, %139 : vector<8x128xf32>
    %c0_63 = arith.constant 0 : index
    %c0_64 = arith.constant 0 : index
    %141 = vector.load %arg2[%c0_63, %c0_64] : memref<8x128xf32, #tpu.memory_space<vmem>>, vector<8x128xf32>
    tpu.vector_store %arg2[%c0_63, %c0_64], %140 {strides = array<i32>} : memref<8x128xf32, #tpu.memory_space<vmem>>, vector<8x128xf32>,
    return
  }
  func.func @transform_0(%arg0: i32) -> (i32, i32) {
    %c0_i32 = arith.constant 0 : i32
    %c0_i32_0 = arith.constant 0 : i32
    return %arg0, %c0_i32 : i32, i32
  }
  func.func @transform_1(%arg0: i32) -> (i32, i32) {
    %c0_i32 = arith.constant 0 : i32
    %c0_i32_0 = arith.constant 0 : i32
    return %arg0, %c0_i32 : i32, i32
  }
}

</mosaic_0001>

<llo_original>
// kernel: tpu_custom_call.1
$region0: #{tpu_custom_call.1}
  #allocation0 [shape = 'u32[]', space=smem, size = 0x4, offset = 0x4, fixed_abs, tag = 'smem constant byte address 0x4 - core index']
  #allocation1 [shape = 'u32[144,128]{1,0:T(1,128)}', space=vmem, size = 0x12000, scoped, tag = 'internal scratch']
  %s0 = inlined_call_operand.hbm [shape: f32[16,128], index: 0, kind: input, shape index: {}]
  %s1 = inlined_call_operand.hbm [shape: f32[16,128], index: 1, kind: output, shape index: {}]
  %s2 = sld [smem:[#allocation0]]
  $region41: #{tpu_custom_call.1} parent=0
    _
  %s4 = ssub.s32 1, %s2
  %s5 = scalar_select 0, %s4, %s2
  $region1: #{tpu_custom_call.1} parent=0
    #allocation2 [shape = 'u8[8192]{0}', space=vmem, size = 0x2000, scoped, tag = 'input window, operand 0']
    #allocation3 [shape = 's32[2]{0}', space=sflag, size = 0x8, scoped, tag = 'scoped memory for tpu_custom_call.1']
    #allocation4 [shape = 's32[2]{0}', space=sflag, size = 0x8, scoped, tag = 'scoped memory for tpu_custom_call.1']
    #allocation5 [shape = 'u8[8192]{0}', space=vmem, size = 0x2000, scoped, tag = 'output window, operand 0']
    %6 = vsyncpa [#allocation3], 0
    %s7 = scalar_lea.sflag [#allocation3], 1
    %8 = vsyncpa %s7, 0
    %9 = vsyncpa [#allocation4], 0
    %s10 = scalar_lea.sflag [#allocation4], 1
    %11 = vsyncpa %s10, 0
    loop: start=0, step=1, limit=4
    $region2: #{tpu_custom_call.1} parent=1 // loop_pre_header
      _
    $region3: #{tpu_custom_call.1} parent=1 // loop_header
      %s13 = sphi 0, %s17
      %p14 = scmp.ge.s32.totalorder %s13, 4
      %s23 = sphi 0, %s25
      %s26 = sphi 0, %s23
      %s27 = sphi 0, %s26
      %s43 = sphi 0, %s27
      %s49 = sphi 0, %s51
      %s52 = sphi 0, %s49
      %s53 = sphi 0, %s52
      %s69 = sphi 0, %s53
    $region4: #{tpu_custom_call.1} parent=1 // loop_header_branch
      %16 = sbr.rel (%p14) target = $region8
    $region5: #{tpu_custom_call.1} parent=1 // loop_body
      %s18 = ssub.s32 %s13, 1
      %s19 = ssub.s32 %s13, 2
      %s20 = sadd.s32 %s13, 1
      %s21 = ssub.s32 %s13, %s20
      %p22 = scmp.eq.s32.totalorder %s21, 0
      %s24 = sadd.s32 %s23, 1
      %s25 = scalar_select %p22, %s23, %s24
      %p28 = pneg %p22
      %p29 = scmp.eq.s32.totalorder %s13, 1
      %p30 = por %p28, %p29
      %p31 = scmp.ne.s32.totalorder %s23, %s26
      %p32 = scmp.eq.s32.totalorder %s13, 0
      %p33 = por %p31, %p32
      %p34 = scmp.ne.s32.totalorder %s23, %s26
      %p35 = scmp.eq.s32.totalorder %s18, 1
      %p36 = por %p34, %p35
      %p37 = scmp.ne.s32.totalorder %s26, %s27
      %p38 = scmp.eq.s32.totalorder %s18, 0
      %p39 = por %p37, %p38
      %p40 = scmp.ne.s32.totalorder %s26, %s27
      %p41 = scmp.eq.s32.totalorder %s19, 1
      %p42 = por %p40, %p41
      %p44 = scmp.ne.s32.totalorder %s27, %s43
      %p45 = scmp.eq.s32.totalorder %s19, 0
      %p46 = por %p44, %p45
      %s47 = ssub.s32 %s13, %s20
      %p48 = scmp.eq.s32.totalorder %s47, 0
      %s50 = sadd.s32 %s49, 1
      %s51 = scalar_select %p48, %s49, %s50
      %p54 = pneg %p48
      %p55 = scmp.eq.s32.totalorder %s13, 1
      %p56 = por %p54, %p55
      %p57 = scmp.ne.s32.totalorder %s49, %s52
      %p58 = scmp.eq.s32.totalorder %s13, 0
      %p59 = por %p57, %p58
      %p60 = scmp.ne.s32.totalorder %s49, %s52
      %p61 = scmp.eq.s32.totalorder %s18, 1
      %p62 = por %p60, %p61
      %p63 = scmp.ne.s32.totalorder %s52, %s53
      %p64 = scmp.eq.s32.totalorder %s18, 0
      %p65 = por %p63, %p64
      %p66 = scmp.ne.s32.totalorder %s52, %s53
      %p67 = scmp.eq.s32.totalorder %s19, 1
      %p68 = por %p66, %p67
      %p70 = scmp.ne.s32.totalorder %s53, %s69
      %p71 = scmp.eq.s32.totalorder %s19, 0
      %p72 = por %p70, %p71
      %p73 = scmp.le.s32.totalorder 1, %s13
      %p74 = scmp.lt.s32.totalorder %s13, 3
      %p75 = pnand %p73, %p74
      %p76 = pneg %p75
      // Predicated region
      $region9: #{tpu_custom_call.1} parent=5 // pred_check
        _
      $region10: #{tpu_custom_call.1} parent=5 // pred_check_branch
        %78 = sbr.rel (%p75) target = $region12
      $region11: #{tpu_custom_call.1} parent=5 // pred_region
        %s79 = ssub.s32 %s13, 1
      $region12: #{tpu_custom_call.1} parent=5 // pred_fallthru
        _
      %p80 = scmp.lt.s32.totalorder %s13, 2
      // Predicated region
      $region13: #{tpu_custom_call.1} parent=5 // pred_check
        %p81 = pneg %p80
      $region14: #{tpu_custom_call.1} parent=5 // pred_check_branch
        %83 = sbr.rel (%p81) target = $region16
      $region15: #{tpu_custom_call.1} parent=5 // pred_region
        // Predicated region
        $region17: #{tpu_custom_call.1} parent=15 // pred_check
          %p84 = pneg %p33
        $region18: #{tpu_custom_call.1} parent=15 // pred_check_branch
          %86 = sbr.rel (%p84) target = $region20
        $region19: #{tpu_custom_call.1} parent=15 // pred_region
          %s87 = sand.u32 %s23, 1
          %s88 = scalar_lea.sflag [#allocation3], %s87
          %s89 = sand.u32 %s23, 1
          %s90 = smul.addr %s89, 8
          %s91 = scalar_lea.vmem [#allocation2], %s90
          %s93 = ssub.s32 128, 128
          %94 = vsyncadd %s88, %s93
          %s95 = smul.addr %s13, 128
          %s96 = scalar_lea.hbm %s0, %s95
          %s98 = sshll.u32 %s91, 4
          %s99 = int_to_ptr.vmem [resolvable:$true] %s98
          %101 = dma.hbm_to_vmem [thread:$0]  %s96, 128, %s99, %s88
        $region20: #{tpu_custom_call.1} parent=15 // pred_fallthru
          _
      $region16: #{tpu_custom_call.1} parent=5 // pred_fallthru
        _
      %p102 = scmp.le.s32.totalorder 1, %s13
      %p103 = scmp.lt.s32.totalorder %s13, 3
      %p104 = pnand %p102, %p103
      %p105 = pneg %p104
      // Predicated region
      $region21: #{tpu_custom_call.1} parent=5 // pred_check
        _
      $region22: #{tpu_custom_call.1} parent=5 // pred_check_branch
        %107 = sbr.rel (%p104) target = $region24
      $region23: #{tpu_custom_call.1} parent=5 // pred_region
        %s108 = ssub.s32 %s13, 1
        %s109 = sand.u32 %s26, 1
        %s110 = scalar_lea.sflag [#allocation3], %s109
        %s111 = sand.u32 %s26, 1
        %s112 = smul.addr %s111, 8
        %s113 = scalar_lea.vmem [#allocation2], %s112
        // Predicated region
        $region25: #{tpu_custom_call.1} parent=23 // pred_check
          %p114 = pneg %p39
        $region26: #{tpu_custom_call.1} parent=23 // pred_check_branch
          %116 = sbr.rel (%p114) target = $region28
        $region27: #{tpu_custom_call.1} parent=23 // pred_region
          %117 = dma.done %s110, 128
        $region28: #{tpu_custom_call.1} parent=23 // pred_fallthru
          _
        %s118 = sand.u32 %s26, 1
        %s119 = scalar_lea.sflag [#allocation3], %s118
        %s120 = sand.u32 %s26, 1
        %s121 = smul.addr %s120, 8
        %s122 = scalar_lea.vmem [#allocation2], %s121
        %p123 = pneg %p39
        %p124 = pneg %p36
        %p125 = pneg %p65
        %p126 = pneg %p62
        %s127 = sand.u32 %s52, 1
        %s128 = scalar_lea.sflag [#allocation4], %s127
        %s129 = sand.u32 %s52, 1
        %s130 = smul.addr %s129, 8
        %s131 = scalar_lea.vmem [#allocation5], %s130
        %v132 = vld [vmem:[%s113] sm:$0xff]
        %vm133 = vcmp.gt.f32.partialorder %v132, -0.4326
        %v134 = vsel %vm133, 0.1441, 0.0
        %v135 = vsub.f32 %v132, 0.4462
        %v136 = vsel %vm133, %v135, %v132
        %vm137 = vcmp.gt.f32.partialorder %v136, 0.7987
        %v138 = vsel %vm137, 1.0263, 0.0
        %v139 = vadd.f32 %v134, %v138
        %v140 = vsub.f32 %v136, 0.9426
        %v141 = vsel %vm137, %v140, %v136
        %vm142 = vcmp.gt.f32.partialorder %v141, 0.1965
        %v143 = vsel %vm142, 0.5819, 0.0
        %v144 = vadd.f32 %v139, %v143
        %v145 = vsub.f32 %v141, 0.5828
        %v146 = vsel %vm142, %v145, %v141
        %vm147 = vcmp.gt.f32.partialorder %v146, -0.0293
        %v148 = vsel %vm147, 0.2583, 0.0
        %v149 = vadd.f32 %v144, %v148
        %v150 = vsub.f32 %v146, 0.2679
        %v151 = vsel %vm147, %v150, %v146
        %vm152 = vcmp.gt.f32.partialorder %v151, 1.7898
        %v153 = vsel %vm152, 0.089, 0.0
        %v154 = vadd.f32 %v149, %v153
        %v155 = vsub.f32 %v151, 0.1929
        %v156 = vsel %vm152, %v155, %v151
        %vm157 = vcmp.gt.f32.partialorder %v156, 0.4043
        %v158 = vsel %vm157, 0.8074, 0.0
        %v159 = vadd.f32 %v154, %v158
        %v160 = vsub.f32 %v156, 1.1032
        %v161 = vsel %vm157, %v160, %v156
        %vm162 = vcmp.gt.f32.partialorder %v161, -0.1738
        %v163 = vsel %vm162, 0.1049, 0.0
        %v164 = vadd.f32 %v159, %v163
        %v165 = vsub.f32 %v161, 0.0062
        %v166 = vsel %vm162, %v165, %v161
        %vm167 = vcmp.gt.f32.partialorder %v166, -0.0356
        %v168 = vsel %vm167, 1.2033, 0.0
        %v169 = vadd.f32 %v164, %v168
        %v170 = vsub.f32 %v166, 1.7608
        %v171 = vsel %vm167, %v170, %v166
        %vm172 = vcmp.gt.f32.partialorder %v171, 2.1835
        %v173 = vsel %vm172, 1.8082, 0.0
        %v174 = vadd.f32 %v169, %v173
        %v175 = vsub.f32 %v171, 1.6892
        %v176 = vsel %vm172, %v175, %v171
        %vm177 = vcmp.gt.f32.partialorder %v176, -0.0467
        %v178 = vsel %vm177, 0.4312, 0.0
        %v179 = vadd.f32 %v174, %v178
        %v180 = vsub.f32 %v176, 1.0465
        %v181 = vsel %vm177, %v180, %v176
        %vm182 = vcmp.gt.f32.partialorder %v181, 2.3067
        %v183 = vsel %vm182, 2.2586, 0.0
        %v184 = vadd.f32 %v179, %v183
        %v185 = vsub.f32 %v181, 2.2203
        %v186 = vsel %vm182, %v185, %v181
        %vm187 = vcmp.gt.f32.partialorder %v186, -1.7284
        %v188 = vsel %vm187, -0.2693, 0.0
        %v189 = vadd.f32 %v184, %v188
        %v190 = vsub.f32 %v186, -0.0518
        %v191 = vsel %vm187, %v190, %v186
        %vm192 = vcmp.gt.f32.partialorder %v191, 1.281
        %v193 = vsel %vm192, 0.8391, 0.0
        %v194 = vadd.f32 %v189, %v193
        %v195 = vsub.f32 %v191, 0.9965
        %v196 = vsel %vm192, %v195, %v191
        %vm197 = vcmp.gt.f32.partialorder %v196, 0.942
        %v198 = vsel %vm197, 0.0463, 0.0
        %v199 = vadd.f32 %v194, %v198
        %v200 = vsub.f32 %v196, 1.2357
        %v201 = vsel %vm197, %v200, %v196
        %vm202 = vcmp.gt.f32.partialorder %v201, -0.245
        %v203 = vsel %vm202, 0.2339, 0.0
        %v204 = vadd.f32 %v199, %v203
        %v205 = vsub.f32 %v201, 0.7535
        %v206 = vsel %vm202, %v205, %v201
        %vm207 = vcmp.gt.f32.partialorder %v206, -0.5279
        %v208 = vsel %vm207, 0.1115, 0.0
        %v209 = vadd.f32 %v204, %v208
        %210 = vst [vmem:[%s131] sm:$0xff] %v209
        %s211 = sand.u32 %s52, 1
        %s212 = scalar_lea.sflag [#allocation4], %s211
        %s213 = sand.u32 %s52, 1
        %s214 = smul.addr %s213, 8
        %s215 = scalar_lea.vmem [#allocation5], %s214
        // Predicated region
        $region29: #{tpu_custom_call.1} parent=23 // pred_check
          %p216 = pneg %p62
        $region30: #{tpu_custom_call.1} parent=23 // pred_check_branch
          %218 = sbr.rel (%p216) target = $region32
        $region31: #{tpu_custom_call.1} parent=23 // pred_region
          %s220 = ssub.s32 128, 128
          %221 = vsyncadd %s212, %s220
          %s222 = smul.addr %s18, 128
          %s223 = scalar_lea.hbm %s1, %s222
          %s225 = sshll.u32 %s215, 4
          %s226 = int_to_ptr.vmem [resolvable:$true] %s225
          %228 = dma.vmem_to_hbm [thread:$0]  %s226, 128, %s223, %s212
        $region32: #{tpu_custom_call.1} parent=23 // pred_fallthru
          _
      $region24: #{tpu_custom_call.1} parent=5 // pred_fallthru
        _
      %p229 = scmp.le.s32.totalorder 2, %s13
      // Predicated region
      $region33: #{tpu_custom_call.1} parent=5 // pred_check
        %p230 = pneg %p229
      $region34: #{tpu_custom_call.1} parent=5 // pred_check_branch
        %232 = sbr.rel (%p230) target = $region36
      $region35: #{tpu_custom_call.1} parent=5 // pred_region
        %s233 = ssub.s32 %s13, 2
        // Predicated region
        $region37: #{tpu_custom_call.1} parent=35 // pred_check
          %p234 = pneg %p68
        $region38: #{tpu_custom_call.1} parent=35 // pred_check_branch
          %236 = sbr.rel (%p234) target = $region40
        $region39: #{tpu_custom_call.1} parent=35 // pred_region
          %s237 = sand.u32 %s53, 1
          %s238 = scalar_lea.sflag [#allocation4], %s237
          %s239 = sand.u32 %s53, 1
          %s240 = smul.addr %s239, 8
          %s241 = scalar_lea.vmem [#allocation5], %s240
          %242 = dma.done %s238, 128
        $region40: #{tpu_custom_call.1} parent=35 // pred_fallthru
          _
      $region36: #{tpu_custom_call.1} parent=5 // pred_fallthru
        _
    $region6: #{tpu_custom_call.1} parent=1 // loop_footer
      %s17 = sadd.s32 1, %s13
    $region7: #{tpu_custom_call.1} parent=1 // loop_footer_branch
      %12 = sbr.rel target = $region3
    $region8: #{tpu_custom_call.1} parent=1 // loop_exit
      _
    %243 = vsyncpa [#allocation3], 1
    %s244 = scalar_lea.sflag [#allocation3], 1
    %245 = vsyncpa %s244, 1
    %246 = vsyncpa [#allocation4], 1
    %s247 = scalar_lea.sflag [#allocation4], 1
    %248 = vsyncpa %s247, 1

</llo_original>
